<compile_context>
chip_gen: v6e
topology: v6e:2x2x1
jax: 0.10.0
libtpu: 0.0.40
codegen_flags: <defaults>
</compile_context>

<pallas_src>
import jax
import jax.numpy as jnp
from jax.experimental import pallas as pl
from jax.experimental.pallas import tpu as pltpu


def _round_up(n: int, m: int) -> int:
    return ((n + m - 1) // m) * m


def _silero_vad_decoder_kernel(
    x_ref, h_ref, c_ref,      # activations: (TB, 128) f32
    w_ref,                    # fused gate weight [Wih^T ; Whh^T]: (256, 512) bf16
    b_ref,                    # combined gate bias (b_ih + b_hh): (1, 512) f32
    cw_ref,                   # conv1d(k=1) weight as a lane vector: (1, 128) f32
    cb_ref,                   # conv1d bias, SMEM scalar: (1,) f32
    h_out_ref, c_out_ref,     # new state: (TB, 128) f32 (aliased with h/c inputs)
    y_ref,                    # lane-dense output slab: (TB, 128) f32
    xh_ref,                   # VMEM scratch: (TB, 256) bf16
):
    # Pack [x | h] into one bf16 operand (static, lane-aligned slices of scratch).
    xh_ref[:, 0:128] = x_ref[...].astype(jnp.bfloat16)
    xh_ref[:, 128:256] = h_ref[...].astype(jnp.bfloat16)

    # Single (TB, 256) x (256, 512) MXU pass with f32 accumulation, then bias.
    gates = jnp.dot(xh_ref[...], w_ref[...], preferred_element_type=jnp.float32)
    gates = gates + b_ref[...]

    # Static 128-aligned gate slices in PyTorch LSTMCell order (i, f, g, o).
    i_g = jax.nn.sigmoid(gates[:, 0:128])
    f_g = jax.nn.sigmoid(gates[:, 128:256])
    g_g = jnp.tanh(gates[:, 256:384])
    o_g = jax.nn.sigmoid(gates[:, 384:512])

    c_new = f_g * c_ref[...] + i_g * g_g
    h_new = o_g * jnp.tanh(c_new)

    h_out_ref[...] = h_new
    c_out_ref[...] = c_new

    # Decoder head: Dropout(identity, eval) -> ReLU -> Conv1d(128->1, k=1) -> Sigmoid.
    # 1x1 conv over channels == lane reduction (VPU multiply + XLU reduce).
    relu_h = jnp.maximum(h_new, 0.0)
    logit = jnp.sum(relu_h * cw_ref[...], axis=-1, keepdims=True) + cb_ref[0]
    y = jax.nn.sigmoid(logit)                                  # (TB, 1)
    # Lane-dense, unmasked store; wrapper reads column 0.
    y_ref[...] = jnp.broadcast_to(y, y_ref.shape)


def silero_vad_decoder_forward(x, state, w_ih, w_hh, b_ih, b_hh, conv_w, conv_b,
                               *, batch_tile=512):
    """Pallas forward: returns (y (B,1,1), new_state (2,B,128))."""
    x = jnp.asarray(x, jnp.float32)
    if x.ndim == 3:
        x = x[:, :, 0]                       # .squeeze(-1)
    B = x.shape[0]
    assert x.shape[1] == 128

    if state is None or state.size == 0:
        h0 = jnp.zeros((B, 128), jnp.float32)
        c0 = jnp.zeros((B, 128), jnp.float32)
    else:
        h0 = jnp.asarray(state[0], jnp.float32)
        c0 = jnp.asarray(state[1], jnp.float32)

    # ---- parameter prep (wrapper glue) --------------------------------------
    # Fused weight: gates = [x | h] @ [Wih^T ; Whh^T]; columns keep PyTorch
    # (i, f, g, o) ordering. bf16 weights, f32 accumulation in the kernel.
    w_fused = jnp.concatenate([w_ih.T, w_hh.T], axis=0).astype(jnp.bfloat16)  # (256, 512)
    b_fused = (b_ih + b_hh).astype(jnp.float32).reshape(1, 512)               # (1, 512)
    cw = jnp.asarray(conv_w, jnp.float32).reshape(1, 128)                     # (1, 128)
    cb = jnp.asarray(conv_b, jnp.float32).reshape(1)                          # (1,)

    # ---- batch tiling: pad to sublane multiple, grid only over batch --------
    tb = batch_tile if B > batch_tile else _round_up(B, 8)
    b_pad = _round_up(B, tb)
    pad = b_pad - B
    if pad:
        x = jnp.pad(x, ((0, pad), (0, 0)))
        h0 = jnp.pad(h0, ((0, pad), (0, 0)))
        c0 = jnp.pad(c0, ((0, pad), (0, 0)))

    grid = (b_pad // tb,)
    act_spec = pl.BlockSpec((tb, 128), lambda i: (i, 0))

    def const_spec(shape):
        # Full-array block with constant index_map -> fetched once, VMEM-resident.
        return pl.BlockSpec(shape, lambda i: (0, 0))

    h_new, c_new, y_slab = pl.pallas_call(
        _silero_vad_decoder_kernel,
        grid=grid,
        in_specs=[
            act_spec, act_spec, act_spec,
            const_spec((256, 512)),
            const_spec((1, 512)),
            const_spec((1, 128)),
            pl.BlockSpec(memory_space=pltpu.MemorySpace.SMEM),
        ],
        out_specs=[act_spec, act_spec, act_spec],
        out_shape=[
            jax.ShapeDtypeStruct((b_pad, 128), jnp.float32),   # h_new
            jax.ShapeDtypeStruct((b_pad, 128), jnp.float32),   # c_new
            jax.ShapeDtypeStruct((b_pad, 128), jnp.float32),   # y slab (lane-dense)
        ],
        scratch_shapes=[pltpu.VMEM((tb, 256), jnp.bfloat16)],
        # In-place state update: h -> h_new, c -> c_new.
        input_output_aliases={1: 0, 2: 1},
        compiler_params=pltpu.CompilerParams(
            dimension_semantics=("parallel",),
        ),
    )(x, h0, c0, w_fused, b_fused, cw, cb)

    y = y_slab[:B, 0].reshape(B, 1, 1)
    state_out = jnp.stack([h_new[:B], c_new[:B]])
    return y, state_out


def _reference_forward(x, state, w_ih, w_hh, b_ih, b_hh, conv_w, conv_b):
    """Pure-jnp f32 reference mirroring the PyTorch module (eval mode)."""
    x2 = x[:, :, 0] if x.ndim == 3 else x
    h, c = state[0], state[1]
    gates = x2 @ w_ih.T + b_ih + h @ w_hh.T + b_hh
    i_g, f_g, g_g, o_g = jnp.split(gates, 4, axis=-1)
    i_g = jax.nn.sigmoid(i_g)
    f_g = jax.nn.sigmoid(f_g)
    g_g = jnp.tanh(g_g)
    o_g = jax.nn.sigmoid(o_g)
    c_new = f_g * c + i_g * g_g
    h_new = o_g * jnp.tanh(c_new)
    z = jnp.maximum(h_new, 0.0)
    y = jax.nn.sigmoid(z @ conv_w.reshape(1, 128).T + conv_b.reshape(1, 1))
    return y.reshape(-1, 1, 1), jnp.stack([h_new, c_new])


if __name__ == "__main__":
    key = jax.random.PRNGKey(0)
    ks = jax.random.split(key, 9)

    B = 4                              # small batch; feature dims are fixed at 128 by the module
    bound = 1.0 / (128.0 ** 0.5)       # PyTorch default init range

    w_ih = jax.random.uniform(ks[0], (512, 128), jnp.float32, -bound, bound)
    w_hh = jax.random.uniform(ks[1], (512, 128), jnp.float32, -bound, bound)
    b_ih = jax.random.uniform(ks[2], (512,), jnp.float32, -bound, bound)
    b_hh = jax.random.uniform(ks[3], (512,), jnp.float32, -bound, bound)
    conv_w = jax.random.uniform(ks[4], (1, 128, 1), jnp.float32, -bound, bound)
    conv_b = jax.random.uniform(ks[5], (1,), jnp.float32, -bound, bound)

    x = jax.random.normal(ks[6], (B, 128, 1), jnp.float32)
    h0 = 0.1 * jax.random.normal(ks[7], (B, 128), jnp.float32)
    c0 = 0.1 * jax.random.normal(ks[8], (B, 128), jnp.float32)
    state0 = jnp.stack([h0, c0])       # (2, B, 128)

    # f32 reference, computed before the kernel call.
    y_want, state_want = _reference_forward(
        x, state0, w_ih, w_hh, b_ih, b_hh, conv_w, conv_b)

    y, state = silero_vad_decoder_forward(
        x, state0, w_ih, w_hh, b_ih, b_hh, conv_w, conv_b)
    y, state = jax.block_until_ready((y, state))

    assert y.shape == (B, 1, 1), y.shape
    assert state.shape == (2, B, 128), state.shape
    y_err = float(jnp.max(jnp.abs(y - y_want)))
    s_err = float(jnp.max(jnp.abs(state - state_want)))
    # bf16 weights in the fused gate matmul -> loose tolerance.
    assert y_err < 5e-2 and s_err < 5e-2, (y_err, s_err)
    print("KERNEL_OK")
</pallas_src>

<mosaic_0001>
module attributes {stable_mosaic.version = 11 : i64} {
  func.func @_silero_vad_decoder_kernel(%arg0: i32, %arg1: memref<8x128xf32, #tpu.memory_space<vmem>>, %arg2: memref<8x128xf32, #tpu.memory_space<vmem>>, %arg3: memref<8x128xf32, #tpu.memory_space<vmem>>, %arg4: memref<256x512xbf16, #tpu.memory_space<vmem>>, %arg5: memref<1x512xf32, #tpu.memory_space<vmem>>, %arg6: memref<1x128xf32, #tpu.memory_space<vmem>>, %arg7: memref<1xf32, #tpu.memory_space<smem>>, %arg8: memref<8x128xf32, #tpu.memory_space<vmem>>, %arg9: memref<8x128xf32, #tpu.memory_space<vmem>>, %arg10: memref<8x128xf32, #tpu.memory_space<vmem>>, %arg11: memref<8x256xbf16, #tpu.memory_space<vmem>>) attributes {dimension_semantics = [#tpu.dimension_semantics<parallel>], iteration_bounds = array<i64: 1>, scalar_prefetch = 0 : i64, scratch_operands = 1 : i64, tpu.core_type = #tpu.core_type<tc>, window_params = [{transform_indices = @transform_0, window_bounds = array<i64: 8, 128>}, {transform_indices = @transform_1, window_bounds = array<i64: 8, 128>}, {transform_indices = @transform_2, window_bounds = array<i64: 8, 128>}, {pipeline_mode = #tpu.pipeline_mode<synchronous>, transform_indices = @transform_3, window_bounds = array<i64: 256, 512>}, {pipeline_mode = #tpu.pipeline_mode<synchronous>, transform_indices = @transform_4, window_bounds = array<i64: 1, 512>}, {pipeline_mode = #tpu.pipeline_mode<synchronous>, transform_indices = @transform_5, window_bounds = array<i64: 1, 128>}, {transform_indices = @transform_6, window_bounds = array<i64: 1>}, {transform_indices = @transform_7, window_bounds = array<i64: 8, 128>}, {transform_indices = @transform_8, window_bounds = array<i64: 8, 128>}, {transform_indices = @transform_9, window_bounds = array<i64: 8, 128>}]} {
    %c0 = arith.constant 0 : index
    %c0_0 = arith.constant 0 : index
    %0 = vector.load %arg1[%c0, %c0_0] : memref<8x128xf32, #tpu.memory_space<vmem>>, vector<8x128xf32>
    %1 = arith.truncf %0 : vector<8x128xf32> to vector<8x128xbf16>
    %c0_1 = arith.constant 0 : index
    %c0_2 = arith.constant 0 : index
    %2 = vector.load %arg11[%c0_1, %c0_2] : memref<8x256xbf16, #tpu.memory_space<vmem>>, vector<8x128xbf16>
    tpu.vector_store %arg11[%c0_1, %c0_2], %1 {strides = array<i32>} : memref<8x256xbf16, #tpu.memory_space<vmem>>, vector<8x128xbf16>,
    %c0_3 = arith.constant 0 : index
    %c0_4 = arith.constant 0 : index
    %3 = vector.load %arg2[%c0_3, %c0_4] : memref<8x128xf32, #tpu.memory_space<vmem>>, vector<8x128xf32>
    %4 = arith.truncf %3 : vector<8x128xf32> to vector<8x128xbf16>
    %c0_5 = arith.constant 0 : index
    %c128 = arith.constant 128 : index
    %5 = vector.load %arg11[%c0_5, %c128] : memref<8x256xbf16, #tpu.memory_space<vmem>>, vector<8x128xbf16>
    tpu.vector_store %arg11[%c0_5, %c128], %4 {strides = array<i32>} : memref<8x256xbf16, #tpu.memory_space<vmem>>, vector<8x128xbf16>,
    %c0_6 = arith.constant 0 : index
    %c0_7 = arith.constant 0 : index
    %6 = vector.load %arg11[%c0_6, %c0_7] : memref<8x256xbf16, #tpu.memory_space<vmem>>, vector<8x256xbf16>
    %c0_8 = arith.constant 0 : index
    %c0_9 = arith.constant 0 : index
    %7 = vector.load %arg4[%c0_8, %c0_9] : memref<256x512xbf16, #tpu.memory_space<vmem>>, vector<256x512xbf16>
    %cst = arith.constant dense<0.000000e+00> : vector<8x512xf32>
    %8 = tpu.matmul %6, %7, %cst {dimension_numbers = #tpu.dot_dimension_numbers<[1], [0], [0], [1], [0, 0, 1, 1], [], []>} : vector<8x256xbf16>, vector<256x512xbf16>, vector<8x512xf32> -> vector<8x512xf32>
    %c0_10 = arith.constant 0 : index
    %c0_11 = arith.constant 0 : index
    %9 = vector.load %arg5[%c0_10, %c0_11] : memref<1x512xf32, #tpu.memory_space<vmem>>, vector<1x512xf32>
    %10 = vector.broadcast %9 : vector<1x512xf32> to vector<8x512xf32>
    %11 = arith.addf %8, %10 : vector<8x512xf32>
    %12 = vector.extract_strided_slice %11 {offsets = [0, 0], sizes = [8, 128], strides = [1, 1]} : vector<8x512xf32> to vector<8x128xf32>
    %13 = arith.negf %12 : vector<8x128xf32>
    %14 = math.exp %13 : vector<8x128xf32>
    %cst_12 = arith.constant 1.000000e+00 : f32
    %15 = vector.broadcast %cst_12 : f32 to vector<8x128xf32>
    %16 = arith.addf %15, %14 : vector<8x128xf32>
    %17 = arith.divf %15, %16 : vector<8x128xf32>
    %18 = vector.extract_strided_slice %11 {offsets = [0, 128], sizes = [8, 128], strides = [1, 1]} : vector<8x512xf32> to vector<8x128xf32>
    %19 = arith.negf %18 : vector<8x128xf32>
    %20 = math.exp %19 : vector<8x128xf32>
    %cst_13 = arith.constant 1.000000e+00 : f32
    %21 = vector.broadcast %cst_13 : f32 to vector<8x128xf32>
    %22 = arith.addf %21, %20 : vector<8x128xf32>
    %23 = arith.divf %21, %22 : vector<8x128xf32>
    %24 = vector.extract_strided_slice %11 {offsets = [0, 256], sizes = [8, 128], strides = [1, 1]} : vector<8x512xf32> to vector<8x128xf32>
    %25 = math.tanh %24 : vector<8x128xf32>
    %26 = vector.extract_strided_slice %11 {offsets = [0, 384], sizes = [8, 128], strides = [1, 1]} : vector<8x512xf32> to vector<8x128xf32>
    %27 = arith.negf %26 : vector<8x128xf32>
    %28 = math.exp %27 : vector<8x128xf32>
    %cst_14 = arith.constant 1.000000e+00 : f32
    %29 = vector.broadcast %cst_14 : f32 to vector<8x128xf32>
    %30 = arith.addf %29, %28 : vector<8x128xf32>
    %31 = arith.divf %29, %30 : vector<8x128xf32>
    %c0_15 = arith.constant 0 : index
    %c0_16 = arith.constant 0 : index
    %32 = vector.load %arg3[%c0_15, %c0_16] : memref<8x128xf32, #tpu.memory_space<vmem>>, vector<8x128xf32>
    %33 = arith.mulf %23, %32 : vector<8x128xf32>
    %34 = arith.mulf %17, %25 : vector<8x128xf32>
    %35 = arith.addf %33, %34 : vector<8x128xf32>
    %36 = math.tanh %35 : vector<8x128xf32>
    %37 = arith.mulf %31, %36 : vector<8x128xf32>
    %c0_17 = arith.constant 0 : index
    %c0_18 = arith.constant 0 : index
    %38 = vector.load %arg8[%c0_17, %c0_18] : memref<8x128xf32, #tpu.memory_space<vmem>>, vector<8x128xf32>
    tpu.vector_store %arg8[%c0_17, %c0_18], %37 {strides = array<i32>} : memref<8x128xf32, #tpu.memory_space<vmem>>, vector<8x128xf32>,
    %c0_19 = arith.constant 0 : index
    %c0_20 = arith.constant 0 : index
    %39 = vector.load %arg9[%c0_19, %c0_20] : memref<8x128xf32, #tpu.memory_space<vmem>>, vector<8x128xf32>
    tpu.vector_store %arg9[%c0_19, %c0_20], %35 {strides = array<i32>} : memref<8x128xf32, #tpu.memory_space<vmem>>, vector<8x128xf32>,
    %cst_21 = arith.constant 0.000000e+00 : f32
    %40 = vector.broadcast %cst_21 : f32 to vector<8x128xf32>
    %41 = arith.maximumf %37, %40 : vector<8x128xf32>
    %c0_22 = arith.constant 0 : index
    %c0_23 = arith.constant 0 : index
    %42 = vector.load %arg6[%c0_22, %c0_23] : memref<1x128xf32, #tpu.memory_space<vmem>>, vector<1x128xf32>
    %43 = vector.broadcast %42 : vector<1x128xf32> to vector<8x128xf32>
    %44 = arith.mulf %41, %43 : vector<8x128xf32>
    %cst_24 = arith.constant dense<0.000000e+00> : vector<8xf32>
    %45 = vector.multi_reduction <add>, %44, %cst_24 [1] : vector<8x128xf32> to vector<8xf32>
    %46 = vector.shape_cast %45 : vector<8xf32> to vector<8x1xf32>
    %c0_25 = arith.constant 0 : index
    %47 = memref.load %arg7[%c0_25] : memref<1xf32, #tpu.memory_space<smem>>
    %48 = vector.broadcast %47 : f32 to vector<8x1xf32>
    %49 = arith.addf %46, %48 : vector<8x1xf32>
    %50 = arith.negf %49 : vector<8x1xf32>
    %51 = math.exp %50 : vector<8x1xf32>
    %cst_26 = arith.constant 1.000000e+00 : f32
    %52 = vector.broadcast %cst_26 : f32 to vector<8x1xf32>
    %53 = arith.addf %52, %51 : vector<8x1xf32>
    %54 = arith.divf %52, %53 : vector<8x1xf32>
    %55 = vector.shape_cast %54 : vector<8x1xf32> to vector<8x1xf32>
    %56 = vector.broadcast %55 : vector<8x1xf32> to vector<8x128xf32>
    %c0_27 = arith.constant 0 : index
    %c0_28 = arith.constant 0 : index
    %57 = vector.load %arg10[%c0_27, %c0_28] : memref<8x128xf32, #tpu.memory_space<vmem>>, vector<8x128xf32>
    tpu.vector_store %arg10[%c0_27, %c0_28], %56 {strides = array<i32>} : memref<8x128xf32, #tpu.memory_space<vmem>>, vector<8x128xf32>,
    return
  }
  func.func @transform_0(%arg0: i32) -> (i32, i32) {
    %c0_i32 = arith.constant 0 : i32
    %c0_i32_0 = arith.constant 0 : i32
    return %arg0, %c0_i32 : i32, i32
  }
  func.func @transform_1(%arg0: i32) -> (i32, i32) {
    %c0_i32 = arith.constant 0 : i32
    %c0_i32_0 = arith.constant 0 : i32
    return %arg0, %c0_i32 : i32, i32
  }
  func.func @transform_2(%arg0: i32) -> (i32, i32) {
    %c0_i32 = arith.constant 0 : i32
    %c0_i32_0 = arith.constant 0 : i32
    return %arg0, %c0_i32 : i32, i32
  }
  func.func @transform_3(%arg0: i32) -> (i32, i32) {
    %c0_i32 = arith.constant 0 : i32
    %c0_i32_0 = arith.constant 0 : i32
    %c0_i32_1 = arith.constant 0 : i32
    return %c0_i32, %c0_i32_0 : i32, i32
  }
  func.func @transform_4(%arg0: i32) -> (i32, i32) {
    %c0_i32 = arith.constant 0 : i32
    %c0_i32_0 = arith.constant 0 : i32
    %c0_i32_1 = arith.constant 0 : i32
    return %c0_i32, %c0_i32_0 : i32, i32
  }
  func.func @transform_5(%arg0: i32) -> (i32, i32) {
    %c0_i32 = arith.constant 0 : i32
    %c0_i32_0 = arith.constant 0 : i32
    %c0_i32_1 = arith.constant 0 : i32
    return %c0_i32, %c0_i32_0 : i32, i32
  }
  func.func @transform_6(%arg0: i32) -> i32 {
    %c0_i32 = arith.constant 0 : i32
    %c0_i32_0 = arith.constant 0 : i32
    return %c0_i32 : i32
  }
  func.func @transform_7(%arg0: i32) -> (i32, i32) {
    %c0_i32 = arith.constant 0 : i32
    %c0_i32_0 = arith.constant 0 : i32
    return %arg0, %c0_i32 : i32, i32
  }
  func.func @transform_8(%arg0: i32) -> (i32, i32) {
    %c0_i32 = arith.constant 0 : i32
    %c0_i32_0 = arith.constant 0 : i32
    return %arg0, %c0_i32 : i32, i32
  }
  func.func @transform_9(%arg0: i32) -> (i32, i32) {
    %c0_i32 = arith.constant 0 : i32
    %c0_i32_0 = arith.constant 0 : i32
    return %arg0, %c0_i32 : i32, i32
  }
}

</mosaic_0001>

<llo_original>
// kernel: tpu_custom_call.1
$region0: #{tpu_custom_call.1}
  #allocation0 [shape = 'u32[]', space=smem, size = 0x4, offset = 0x4, fixed_abs, tag = 'smem constant byte address 0x4 - core index']
  #allocation1 [shape = 'u32[144,128]{1,0:T(1,128)}', space=vmem, size = 0x12000, scoped, tag = 'internal scratch']
  #allocation2 [shape = 'bf16[8,256]{1,0:T(8,128)(2,1)}', space=vmem, size = 0x1000, scoped, tag = 'scratch operand']
  #allocation3 [shape = 'f32[1]{0:T(128)S(6)}', space=smem, size = 0x200, scoped, tag = 'scoped memory for tpu_custom_call.1']
  %s0 = inlined_call_operand.vmem [shape: f32[8,128], index: 0, kind: input, shape index: {}]
  %s1 = inlined_call_operand.hbm [shape: f32[8,128], index: 1, kind: input, shape index: {}, may-alias: {1,7}]
  %s2 = inlined_call_operand.hbm [shape: f32[8,128], index: 2, kind: input, shape index: {}, may-alias: {2,8}]
  %s3 = inlined_call_operand.hbm [shape: bf16[256,512], index: 3, kind: input, shape index: {}]
  %s4 = inlined_call_operand.vmem [shape: f32[1,512], index: 4, kind: input, shape index: {}]
  %s5 = inlined_call_operand.vmem [shape: f32[1,128], index: 5, kind: input, shape index: {}]
  %s6 = inlined_call_operand.<no memory space> [shape: f32[1], index: 6, kind: input, shape index: {}]
  %s7 = inlined_call_operand.hbm [shape: f32[8,128], index: 7, kind: output, shape index: {0}, may-alias: {1,7}]
  %s8 = inlined_call_operand.hbm [shape: f32[8,128], index: 8, kind: output, shape index: {1}, may-alias: {2,8}]
  %s9 = inlined_call_operand.hbm [shape: f32[8,128], index: 9, kind: output, shape index: {2}]
  %10 = xla_tuple %s7, %s8, %s9
  %s11 = sld [smem:[#allocation0]]
  $region66: #{tpu_custom_call.1} parent=0
    _
  %s13 = ssub.s32 1, %s11
  %s14 = scalar_select 0, %s13, %s11
  %15 = sst [smem:[#allocation3]] %s6
  $region1: #{tpu_custom_call.1} parent=0
    #allocation4 [shape = 'u8[4096]{0}', space=vmem, size = 0x1000, scoped, tag = 'input window, operand 1, single buffered']
    #allocation5 [shape = 's32[1]{0}', space=sflag, size = 0x4, scoped, tag = 'scoped memory for tpu_custom_call.1']
    #allocation6 [shape = 's32[1]{0}', space=sflag, size = 0x4, scoped, tag = 'scoped memory for tpu_custom_call.1']
    #allocation7 [shape = 'u8[4096]{0}', space=vmem, size = 0x1000, scoped, tag = 'input window, operand 2, single buffered']
    #allocation8 [shape = 's32[1]{0}', space=sflag, size = 0x4, scoped, tag = 'scoped memory for tpu_custom_call.1']
    #allocation9 [shape = 'u8[262144]{0}', space=vmem, size = 0x40000, scoped, tag = 'input window, operand 3, single buffered']
    #allocation10 [shape = 'u8[4096]{0}', space=vmem, size = 0x1000, scoped, tag = 'output window, operand 0, single buffered']
    #allocation11 [shape = 'u8[4096]{0}', space=vmem, size = 0x1000, scoped, tag = 'output window, operand 1, single buffered']
    #allocation12 [shape = 's32[1]{0}', space=sflag, size = 0x4, scoped, tag = 'scoped memory for tpu_custom_call.1']
    #allocation13 [shape = 'u8[4096]{0}', space=vmem, size = 0x1000, scoped, tag = 'output window, operand 2, single buffered']
    %16 = vsyncpa [#allocation5], 0
    %17 = vsyncpa [#allocation8], 0
    %18 = vsyncpa [#allocation6], 0
    %19 = vsyncpa [#allocation12], 0
    // Predicated region
    $region2: #{tpu_custom_call.1} parent=1 // pred_check
      _
    $region3: #{tpu_custom_call.1} parent=1 // pred_check_branch
      %21 = sbr.rel (0) target = $region5
    $region4: #{tpu_custom_call.1} parent=1 // pred_region
      _
    $region5: #{tpu_custom_call.1} parent=1 // pred_fallthru
      _
    // Predicated region
    $region6: #{tpu_custom_call.1} parent=1 // pred_check
      _
    $region7: #{tpu_custom_call.1} parent=1 // pred_check_branch
      %23 = sbr.rel (0) target = $region9
    $region8: #{tpu_custom_call.1} parent=1 // pred_region
      %s25 = ssub.s32 128, 128
      %26 = vsyncadd [#allocation5], %s25
      %s28 = sshll.u32 [#allocation4], 4
      %s29 = int_to_ptr.vmem [resolvable:$true] %s28
      %31 = dma.hbm_to_vmem [thread:$0]  %s1, 128, %s29, [#allocation5]
    $region9: #{tpu_custom_call.1} parent=1 // pred_fallthru
      _
    // Predicated region
    $region10: #{tpu_custom_call.1} parent=1 // pred_check
      _
    $region11: #{tpu_custom_call.1} parent=1 // pred_check_branch
      %33 = sbr.rel (0) target = $region13
    $region12: #{tpu_custom_call.1} parent=1 // pred_region
      %s35 = ssub.s32 128, 128
      %36 = vsyncadd [#allocation8], %s35
      %s38 = sshll.u32 [#allocation7], 4
      %s39 = int_to_ptr.vmem [resolvable:$true] %s38
      %41 = dma.hbm_to_vmem [thread:$0]  %s2, 128, %s39, [#allocation8]
    $region13: #{tpu_custom_call.1} parent=1 // pred_fallthru
      _
    // Predicated region
    $region14: #{tpu_custom_call.1} parent=1 // pred_check
      _
    $region15: #{tpu_custom_call.1} parent=1 // pred_check_branch
      %43 = sbr.rel (0) target = $region17
    $region16: #{tpu_custom_call.1} parent=1 // pred_region
      %s45 = ssub.s32 8192, 8192
      %46 = vsyncadd [#allocation8], %s45
      %s47 = sshll.u32 [#allocation9], 4
      %s48 = int_to_ptr.vmem [resolvable:$true] %s47
      %53 = dma.hbm_to_vmem [thread:$0]  %s3, 8192, %s48, [#allocation8], 256, 256, 16
    $region17: #{tpu_custom_call.1} parent=1 // pred_fallthru
      _
    // Predicated region
    $region18: #{tpu_custom_call.1} parent=1 // pred_check
      _
    $region19: #{tpu_custom_call.1} parent=1 // pred_check_branch
      %55 = sbr.rel (0) target = $region21
    $region20: #{tpu_custom_call.1} parent=1 // pred_region
      _
    $region21: #{tpu_custom_call.1} parent=1 // pred_fallthru
      _
    // Predicated region
    $region22: #{tpu_custom_call.1} parent=1 // pred_check
      _
    $region23: #{tpu_custom_call.1} parent=1 // pred_check_branch
      %57 = sbr.rel (0) target = $region25
    $region24: #{tpu_custom_call.1} parent=1 // pred_region
      _
    $region25: #{tpu_custom_call.1} parent=1 // pred_fallthru
      _
    // Predicated region
    $region26: #{tpu_custom_call.1} parent=1 // pred_check
      _
    $region27: #{tpu_custom_call.1} parent=1 // pred_check_branch
      %59 = sbr.rel (0) target = $region29
    $region28: #{tpu_custom_call.1} parent=1 // pred_region
      _
    $region29: #{tpu_custom_call.1} parent=1 // pred_fallthru
      _
    // Predicated region
    $region30: #{tpu_custom_call.1} parent=1 // pred_check
      _
    $region31: #{tpu_custom_call.1} parent=1 // pred_check_branch
      %61 = sbr.rel (0) target = $region33
    $region32: #{tpu_custom_call.1} parent=1 // pred_region
      %62 = dma.done [#allocation5], 128
    $region33: #{tpu_custom_call.1} parent=1 // pred_fallthru
      _
    // Predicated region
    $region34: #{tpu_custom_call.1} parent=1 // pred_check
      _
    $region35: #{tpu_custom_call.1} parent=1 // pred_check_branch
      %64 = sbr.rel (0) target = $region37
    $region36: #{tpu_custom_call.1} parent=1 // pred_region
      %65 = dma.done [#allocation8], 128
    $region37: #{tpu_custom_call.1} parent=1 // pred_fallthru
      _
    // Predicated region
    $region38: #{tpu_custom_call.1} parent=1 // pred_check
      _
    $region39: #{tpu_custom_call.1} parent=1 // pred_check_branch
      %67 = sbr.rel (0) target = $region41
    $region40: #{tpu_custom_call.1} parent=1 // pred_region
      %68 = dma.done [#allocation8], 8192
    $region41: #{tpu_custom_call.1} parent=1 // pred_fallthru
      _
    %v69 = vld [vmem:[%s0] sm:$0xff]
    %v70 = vpack.c.bf16 %v69, %v69
    %71 = vst [vmem:[#allocation2] sm:$0xf] %v70
    %v72 = vld [vmem:[#allocation4] sm:$0xff]
    %v73 = vpack.c.bf16 %v72, %v72
    %74 = vst [vmem:[#allocation2 + $0x4] sm:$0xf] %v73
    %v75 = vld [vmem:[#allocation2] sm:$0xff]
    %v76 = vld [vmem:[#allocation9] sm:$0xff]
    %v77 = vld [vmem:[#allocation9 + $0x8] sm:$0xff]
    %v78 = vld [vmem:[#allocation9 + $0x10] sm:$0xff]
    %v79 = vld [vmem:[#allocation9 + $0x18] sm:$0xff]
    %v80 = vld [vmem:[#allocation9 + $0x20] sm:$0xff]
    %v81 = vld [vmem:[#allocation9 + $0x28] sm:$0xff]
    %v82 = vld [vmem:[#allocation9 + $0x30] sm:$0xff]
    %v83 = vld [vmem:[#allocation9 + $0x38] sm:$0xff]
    %v84 = vld [vmem:[#allocation9 + $0x40] sm:$0xff]
    %v85 = vld [vmem:[#allocation9 + $0x48] sm:$0xff]
    %v86 = vld [vmem:[#allocation9 + $0x50] sm:$0xff]
    %v87 = vld [vmem:[#allocation9 + $0x58] sm:$0xff]
    %v88 = vld [vmem:[#allocation9 + $0x60] sm:$0xff]
    %v89 = vld [vmem:[#allocation9 + $0x68] sm:$0xff]
    %v90 = vld [vmem:[#allocation9 + $0x70] sm:$0xff]
    %v91 = vld [vmem:[#allocation9 + $0x78] sm:$0xff]
    %v92 = vld [vmem:[#allocation9 + $0x80] sm:$0xff]
    %v93 = vld [vmem:[#allocation9 + $0x88] sm:$0xff]
    %v94 = vld [vmem:[#allocation9 + $0x90] sm:$0xff]
    %v95 = vld [vmem:[#allocation9 + $0x98] sm:$0xff]
    %v96 = vld [vmem:[#allocation9 + $0xa0] sm:$0xff]
    %v97 = vld [vmem:[#allocation9 + $0xa8] sm:$0xff]
    %v98 = vld [vmem:[#allocation9 + $0xb0] sm:$0xff]
    %v99 = vld [vmem:[#allocation9 + $0xb8] sm:$0xff]
    %v100 = vld [vmem:[#allocation9 + $0xc0] sm:$0xff]
    %v101 = vld [vmem:[#allocation9 + $0xc8] sm:$0xff]
    %v102 = vld [vmem:[#allocation9 + $0xd0] sm:$0xff]
    %v103 = vld [vmem:[#allocation9 + $0xd8] sm:$0xff]
    %v104 = vld [vmem:[#allocation9 + $0xe0] sm:$0xff]
    %v105 = vld [vmem:[#allocation9 + $0xe8] sm:$0xff]
    %v106 = vld [vmem:[#allocation9 + $0xf0] sm:$0xff]
    %v107 = vld [vmem:[#allocation9 + $0xf8] sm:$0xff]
    %v108 = vld [vmem:[#allocation9 + $0x100] sm:$0xff]
    %v109 = vld [vmem:[#allocation9 + $0x108] sm:$0xff]
    %v110 = vld [vmem:[#allocation9 + $0x110] sm:$0xff]
    %v111 = vld [vmem:[#allocation9 + $0x118] sm:$0xff]
    %v112 = vld [vmem:[#allocation9 + $0x120] sm:$0xff]
    %v113 = vld [vmem:[#allocation9 + $0x128] sm:$0xff]
    %v114 = vld [vmem:[#allocation9 + $0x130] sm:$0xff]
    %v115 = vld [vmem:[#allocation9 + $0x138] sm:$0xff]
    %v116 = vld [vmem:[#allocation9 + $0x140] sm:$0xff]
    %v117 = vld [vmem:[#allocation9 + $0x148] sm:$0xff]
    %v118 = vld [vmem:[#allocation9 + $0x150] sm:$0xff]
    %v119 = vld [vmem:[#allocation9 + $0x158] sm:$0xff]
    %v120 = vld [vmem:[#allocation9 + $0x160] sm:$0xff]
    %v121 = vld [vmem:[#allocation9 + $0x168] sm:$0xff]
    %v122 = vld [vmem:[#allocation9 + $0x170] sm:$0xff]
    %v123 = vld [vmem:[#allocation9 + $0x178] sm:$0xff]
    %v124 = vld [vmem:[#allocation9 + $0x180] sm:$0xff]
    %v125 = vld [vmem:[#allocation9 + $0x188] sm:$0xff]
    %v126 = vld [vmem:[#allocation9 + $0x190] sm:$0xff]
    %v127 = vld [vmem:[#allocation9 + $0x198] sm:$0xff]
    %v128 = vld [vmem:[#allocation9 + $0x1a0] sm:$0xff]
    %v129 = vld [vmem:[#allocation9 + $0x1a8] sm:$0xff]
    %v130 = vld [vmem:[#allocation9 + $0x1b0] sm:$0xff]
    %v131 = vld [vmem:[#allocation9 + $0x1b8] sm:$0xff]
    %v132 = vld [vmem:[#allocation9 + $0x1c0] sm:$0xff]
    %v133 = vld [vmem:[#allocation9 + $0x1c8] sm:$0xff]
    %v134 = vld [vmem:[#allocation9 + $0x1d0] sm:$0xff]
    %v135 = vld [vmem:[#allocation9 + $0x1d8] sm:$0xff]
    %v136 = vld [vmem:[#allocation9 + $0x1e0] sm:$0xff]
    %v137 = vld [vmem:[#allocation9 + $0x1e8] sm:$0xff]
    %v138 = vld [vmem:[#allocation9 + $0x1f0] sm:$0xff]
    %v139 = vld [vmem:[#allocation9 + $0x1f8] sm:$0xff]
    %v140 = vld [vmem:[%s4] sm:$0xf]
    %v142 = vlaneseq
    %v143 = vshrl.u32 %v142, 7
    %v144 = vsub.s32 0, %v143
    %v145 = vrot.slane %v140, %v144
    %v146 = vlaneseq
    %v147 = vshrl.u32 %v146, 7
    %v148 = vsub.s32 1, %v147
    %v149 = vrot.slane %v140, %v148
    %v150 = vlaneseq
    %v151 = vshrl.u32 %v150, 7
    %v152 = vsub.s32 2, %v151
    %v153 = vrot.slane %v140, %v152
    %v154 = vlaneseq
    %v155 = vshrl.u32 %v154, 7
    %v156 = vsub.s32 3, %v155
    %v157 = vrot.slane %v140, %v156
    %v163 = vunpack.c.l.b16 %v75
    %v164 = vunpack.c.h.b16 %v75
    %v165 = vpack.c.b16 %v163, %v163
    %v166 = vpack.c.b16 %v164, %v164
    %v233 = vunpack.c.l.b16 %v76
    %v234 = vunpack.c.h.b16 %v76
    %v235 = vunpack.c.l.b16 %v77
    %v236 = vunpack.c.h.b16 %v77
    %v237 = vunpack.c.l.b16 %v78
    %v238 = vunpack.c.h.b16 %v78
    %v239 = vunpack.c.l.b16 %v79
    %v240 = vunpack.c.h.b16 %v79
    %v241 = vunpack.c.l.b16 %v80
    %v242 = vunpack.c.h.b16 %v80
    %v243 = vunpack.c.l.b16 %v81
    %v244 = vunpack.c.h.b16 %v81
    %v245 = vunpack.c.l.b16 %v82
    %v246 = vunpack.c.h.b16 %v82
    %v247 = vunpack.c.l.b16 %v83
    %v248 = vunpack.c.h.b16 %v83
    %v249 = vunpack.c.l.b16 %v84
    %v250 = vunpack.c.h.b16 %v84
    %v251 = vunpack.c.l.b16 %v85
    %v252 = vunpack.c.h.b16 %v85
    %v253 = vunpack.c.l.b16 %v86
    %v254 = vunpack.c.h.b16 %v86
    %v255 = vunpack.c.l.b16 %v87
    %v256 = vunpack.c.h.b16 %v87
    %v257 = vunpack.c.l.b16 %v88
    %v258 = vunpack.c.h.b16 %v88
    %v259 = vunpack.c.l.b16 %v89
    %v260 = vunpack.c.h.b16 %v89
    %v261 = vunpack.c.l.b16 %v90
    %v262 = vunpack.c.h.b16 %v90
    %v263 = vunpack.c.l.b16 %v91
    %v264 = vunpack.c.h.b16 %v91
    %v265 = vunpack.c.l.b16 %v92
    %v266 = vunpack.c.h.b16 %v92
    %v267 = vunpack.c.l.b16 %v93
    %v268 = vunpack.c.h.b16 %v93
    %v269 = vunpack.c.l.b16 %v94
    %v270 = vunpack.c.h.b16 %v94
    %v271 = vunpack.c.l.b16 %v95
    %v272 = vunpack.c.h.b16 %v95
    %v273 = vunpack.c.l.b16 %v96
    %v274 = vunpack.c.h.b16 %v96
    %v275 = vunpack.c.l.b16 %v97
    %v276 = vunpack.c.h.b16 %v97
    %v277 = vunpack.c.l.b16 %v98
    %v278 = vunpack.c.h.b16 %v98
    %v279 = vunpack.c.l.b16 %v99
    %v280 = vunpack.c.h.b16 %v99
    %v281 = vunpack.c.l.b16 %v100
    %v282 = vunpack.c.h.b16 %v100
    %v283 = vunpack.c.l.b16 %v101
    %v284 = vunpack.c.h.b16 %v101
    %v285 = vunpack.c.l.b16 %v102
    %v286 = vunpack.c.h.b16 %v102
    %v287 = vunpack.c.l.b16 %v103
    %v288 = vunpack.c.h.b16 %v103
    %v289 = vunpack.c.l.b16 %v104
    %v290 = vunpack.c.h.b16 %v104
    %v291 = vunpack.c.l.b16 %v105
    %v292 = vunpack.c.h.b16 %v105
    %v293 = vunpack.c.l.b16 %v106
    %v294 = vunpack.c.h.b16 %v106
    %v295 = vunpack.c.l.b16 %v107
    %v296 = vunpack.c.h.b16 %v107
    %v297 = vunpack.c.l.b16 %v108
    %v298 = vunpack.c.h.b16 %v108
    %v299 = vunpack.c.l.b16 %v109
    %v300 = vunpack.c.h.b16 %v109
    %v301 = vunpack.c.l.b16 %v110
    %v302 = vunpack.c.h.b16 %v110
    %v303 = vunpack.c.l.b16 %v111
    %v304 = vunpack.c.h.b16 %v111
    %v305 = vunpack.c.l.b16 %v112
    %v306 = vunpack.c.h.b16 %v112
    %v307 = vunpack.c.l.b16 %v113
    %v308 = vunpack.c.h.b16 %v113
    %v309 = vunpack.c.l.b16 %v114
    %v310 = vunpack.c.h.b16 %v114
    %v311 = vunpack.c.l.b16 %v115
    %v312 = vunpack.c.h.b16 %v115
    %v313 = vunpack.c.l.b16 %v116
    %v314 = vunpack.c.h.b16 %v116
    %v315 = vunpack.c.l.b16 %v117
    %v316 = vunpack.c.h.b16 %v117
    %v317 = vunpack.c.l.b16 %v118
    %v318 = vunpack.c.h.b16 %v118
    %v319 = vunpack.c.l.b16 %v119
    %v320 = vunpack.c.h.b16 %v119
    %v321 = vunpack.c.l.b16 %v120
    %v322 = vunpack.c.h.b16 %v120
    %v323 = vunpack.c.l.b16 %v121
    %v324 = vunpack.c.h.b16 %v121
    %v325 = vunpack.c.l.b16 %v122
    %v326 = vunpack.c.h.b16 %v122
    %v327 = vunpack.c.l.b16 %v123
    %v328 = vunpack.c.h.b16 %v123
    %v329 = vunpack.c.l.b16 %v124
    %v330 = vunpack.c.h.b16 %v124
    %v331 = vunpack.c.l.b16 %v125
    %v332 = vunpack.c.h.b16 %v125
    %v333 = vunpack.c.l.b16 %v126
    %v334 = vunpack.c.h.b16 %v126
    %v335 = vunpack.c.l.b16 %v127
    %v336 = vunpack.c.h.b16 %v127
    %v337 = vunpack.c.l.b16 %v128
    %v338 = vunpack.c.h.b16 %v128
    %v339 = vunpack.c.l.b16 %v129
    %v340 = vunpack.c.h.b16 %v129
    %v341 = vunpack.c.l.b16 %v130
    %v342 = vunpack.c.h.b16 %v130
    %v343 = vunpack.c.l.b16 %v131
    %v344 = vunpack.c.h.b16 %v131
    %v345 = vunpack.c.l.b16 %v132
    %v346 = vunpack.c.h.b16 %v132
    %v347 = vunpack.c.l.b16 %v133
    %v348 = vunpack.c.h.b16 %v133
    %v349 = vunpack.c.l.b16 %v134
    %v350 = vunpack.c.h.b16 %v134
    %v351 = vunpack.c.l.b16 %v135
    %v352 = vunpack.c.h.b16 %v135
    %v353 = vunpack.c.l.b16 %v136
    %v354 = vunpack.c.h.b16 %v136
    %v355 = vunpack.c.l.b16 %v137
    %v356 = vunpack.c.h.b16 %v137
    %v357 = vunpack.c.l.b16 %v138
    %v358 = vunpack.c.h.b16 %v138
    %v359 = vunpack.c.l.b16 %v139
    %v360 = vunpack.c.h.b16 %v139
    %v361 = vpack.c.b16 %v237, %v233
    %v362 = vpack.c.b16 %v238, %v234
    %v363 = vpack.c.b16 %v239, %v235
    %v364 = vpack.c.b16 %v240, %v236
    %v365 = vpack.c.b16 %v245, %v241
    %v366 = vpack.c.b16 %v246, %v242
    %v367 = vpack.c.b16 %v247, %v243
    %v368 = vpack.c.b16 %v248, %v244
    %v369 = vpack.c.b16 %v253, %v249
    %v370 = vpack.c.b16 %v254, %v250
    %v371 = vpack.c.b16 %v255, %v251
    %v372 = vpack.c.b16 %v256, %v252
    %v373 = vpack.c.b16 %v261, %v257
    %v374 = vpack.c.b16 %v262, %v258
    %v375 = vpack.c.b16 %v263, %v259
    %v376 = vpack.c.b16 %v264, %v260
    %v377 = vpack.c.b16 %v269, %v265
    %v378 = vpack.c.b16 %v270, %v266
    %v379 = vpack.c.b16 %v271, %v267
    %v380 = vpack.c.b16 %v272, %v268
    %v381 = vpack.c.b16 %v277, %v273
    %v382 = vpack.c.b16 %v278, %v274
    %v383 = vpack.c.b16 %v279, %v275
    %v384 = vpack.c.b16 %v280, %v276
    %v385 = vpack.c.b16 %v285, %v281
    %v386 = vpack.c.b16 %v286, %v282
    %v387 = vpack.c.b16 %v287, %v283
    %v388 = vpack.c.b16 %v288, %v284
    %v389 = vpack.c.b16 %v293, %v289
    %v390 = vpack.c.b16 %v294, %v290
    %v391 = vpack.c.b16 %v295, %v291
    %v392 = vpack.c.b16 %v296, %v292
    %v393 = vpack.c.b16 %v301, %v297
    %v394 = vpack.c.b16 %v302, %v298
    %v395 = vpack.c.b16 %v303, %v299
    %v396 = vpack.c.b16 %v304, %v300
    %v397 = vpack.c.b16 %v309, %v305
    %v398 = vpack.c.b16 %v310, %v306
    %v399 = vpack.c.b16 %v311, %v307
    %v400 = vpack.c.b16 %v312, %v308
    %v401 = vpack.c.b16 %v317, %v313
    %v402 = vpack.c.b16 %v318, %v314
    %v403 = vpack.c.b16 %v319, %v315
    %v404 = vpack.c.b16 %v320, %v316
    %v405 = vpack.c.b16 %v325, %v321
    %v406 = vpack.c.b16 %v326, %v322
    %v407 = vpack.c.b16 %v327, %v323
    %v408 = vpack.c.b16 %v328, %v324
    %v409 = vpack.c.b16 %v333, %v329
    %v410 = vpack.c.b16 %v334, %v330
    %v411 = vpack.c.b16 %v335, %v331
    %v412 = vpack.c.b16 %v336, %v332
    %v413 = vpack.c.b16 %v341, %v337
    %v414 = vpack.c.b16 %v342, %v338
    %v415 = vpack.c.b16 %v343, %v339
    %v416 = vpack.c.b16 %v344, %v340
    %v417 = vpack.c.b16 %v349, %v345
    %v418 = vpack.c.b16 %v350, %v346
    %v419 = vpack.c.b16 %v351, %v347
    %v420 = vpack.c.b16 %v352, %v348
    %v421 = vpack.c.b16 %v357, %v353
    %v422 = vpack.c.b16 %v358, %v354
    %v423 = vpack.c.b16 %v359, %v355
    %v424 = vpack.c.b16 %v360, %v356
    %489 = vmatprep.subr.bf16.mxu0 %v390
    %490 = vmatpush1.bf16.msra.mxu0 %v389
    %491 = vmatprep.subr.bf16.mxu0 %v386
    %492 = vmatpush1.bf16.msra.mxu0 %v385
    %493 = vmatprep.subr.bf16.mxu0 %v382
    %494 = vmatpush1.bf16.msra.mxu0 %v381
    %495 = vmatprep.subr.bf16.mxu0 %v378
    %496 = vmatpush1.bf16.msra.mxu0 %v377
    %497 = vmatprep.subr.bf16.mxu0 %v374
    %498 = vmatpush1.bf16.msra.mxu0 %v373
    %499 = vmatprep.subr.bf16.mxu0 %v370
    %500 = vmatpush1.bf16.msra.mxu0 %v369
    %501 = vmatprep.subr.bf16.mxu0 %v366
    %502 = vmatpush1.bf16.msra.mxu0 %v365
    %503 = vmatprep.subr.bf16.mxu0 %v362
    %504 = vmatpush1.bf16.msra.mxu0 %v361
    %505 = vmatprep.subr.bf16.mxu0 %v422
    %506 = vmatpush2.bf16.msra.mxu0 %v421
    %507 = vmatprep.subr.bf16.mxu0 %v418
    %508 = vmatpush2.bf16.msra.mxu0 %v417
    %509 = vmatprep.subr.bf16.mxu0 %v414
    %510 = vmatpush2.bf16.msra.mxu0 %v413
    %511 = vmatprep.subr.bf16.mxu0 %v410
    %512 = vmatpush2.bf16.msra.mxu0 %v409
    %513 = vmatprep.subr.bf16.mxu0 %v406
    %514 = vmatpush2.bf16.msra.mxu0 %v405
    %515 = vmatprep.subr.bf16.mxu0 %v402
    %516 = vmatpush2.bf16.msra.mxu0 %v401
    %517 = vmatprep.subr.bf16.mxu0 %v398
    %518 = vmatpush2.bf16.msra.mxu0 %v397
    %519 = vmatprep.subr.bf16.mxu0 %v394
    %520 = vmatpush2.bf16.msra.mxu0 %v393
    %521 = vmatprep.mubr.bf16.mxu0 %v166
    %522 = vmatmul.mubr.bf16.gmra.mxu0 %v165
    %v523 = vpop.f32.mrf.mxu0
    %v524 = vadd.f32 %v145, %v523
    %v525 = vpop.f32.mrf.mxu0
    %v526 = vadd.f32 %v149, %v525
    %v527 = vpop.f32.mrf.mxu0
    %v528 = vpop.f32.mrf.mxu0
    %529 = vdwg.mxu0
    %530 = vmatprep.subr.bf16.mxu0 %v392
    %531 = vmatpush1.bf16.msra.mxu0 %v391
    %532 = vmatprep.subr.bf16.mxu0 %v388
    %533 = vmatpush1.bf16.msra.mxu0 %v387
    %534 = vmatprep.subr.bf16.mxu0 %v384
    %535 = vmatpush1.bf16.msra.mxu0 %v383
    %536 = vmatprep.subr.bf16.mxu0 %v380
    %537 = vmatpush1.bf16.msra.mxu0 %v379
    %538 = vmatprep.subr.bf16.mxu0 %v376
    %539 = vmatpush1.bf16.msra.mxu0 %v375
    %540 = vmatprep.subr.bf16.mxu0 %v372
    %541 = vmatpush1.bf16.msra.mxu0 %v371
    %542 = vmatprep.subr.bf16.mxu0 %v368
    %543 = vmatpush1.bf16.msra.mxu0 %v367
    %544 = vmatprep.subr.bf16.mxu0 %v364
    %545 = vmatpush1.bf16.msra.mxu0 %v363
    %546 = vmatprep.subr.bf16.mxu0 %v424
    %547 = vmatpush2.bf16.msra.mxu0 %v423
    %548 = vmatprep.subr.bf16.mxu0 %v420
    %549 = vmatpush2.bf16.msra.mxu0 %v419
    %550 = vmatprep.subr.bf16.mxu0 %v416
    %551 = vmatpush2.bf16.msra.mxu0 %v415
    %552 = vmatprep.subr.bf16.mxu0 %v412
    %553 = vmatpush2.bf16.msra.mxu0 %v411
    %554 = vmatprep.subr.bf16.mxu0 %v408
    %555 = vmatpush2.bf16.msra.mxu0 %v407
    %556 = vmatprep.subr.bf16.mxu0 %v404
    %557 = vmatpush2.bf16.msra.mxu0 %v403
    %558 = vmatprep.subr.bf16.mxu0 %v400
    %559 = vmatpush2.bf16.msra.mxu0 %v399
    %560 = vmatprep.subr.bf16.mxu0 %v396
    %561 = vmatpush2.bf16.msra.mxu0 %v395
    %562 = vmatprep.mubr.bf16.mxu0 %v166
    %563 = vmatmul.mubr.bf16.gmra.mxu0 %v165
    %v564 = vpop.f32.mrf.mxu0
    %v565 = vadd.f32 %v153, %v564
    %v566 = vpop.f32.mrf.mxu0
    %v567 = vadd.f32 %v157, %v566
    %v568 = vpop.f32.mrf.mxu0
    %v569 = vpop.f32.mrf.mxu0
    %570 = vdwg.mxu0
    %v571 = vxor.u32 %v524, 2147483648
    %v572 = vmul.f32 %v571, 1.442695
    %v573 = vpow.pop %v572
    %v574 = vadd.f32 %v573, 1.0
    %v575 = vrcp.pop %v574
    %v576 = vmul.f32 1.0, %v575
    %v577 = vxor.u32 %v526, 2147483648
    %v578 = vmul.f32 %v577, 1.442695
    %v579 = vpow.pop %v578
    %v580 = vadd.f32 %v579, 1.0
    %v581 = vrcp.pop %v580
    %v582 = vmul.f32 1.0, %v581
    %v583 = vtanh.pop %v565
    %v584 = vxor.u32 %v567, 2147483648
    %v585 = vmul.f32 %v584, 1.442695
    %v586 = vpow.pop %v585
    %v587 = vadd.f32 %v586, 1.0
    %v588 = vrcp.pop %v587
    %v589 = vmul.f32 1.0, %v588
    %v590 = vld [vmem:[#allocation7] sm:$0xff]
    %v591 = vmul.f32 %v582, %v590
    %v592 = vmul.f32 %v576, %v583
    %v593 = vadd.f32 %v591, %v592
    %v594 = vtanh.pop %v593
    %v595 = vmul.f32 %v589, %v594
    %596 = vst [vmem:[#allocation10] sm:$0xff] %v595
    %597 = vst [vmem:[#allocation11] sm:$0xff] %v593
    %v598 = vmax.f32 %v595, 0.0
    %v599 = vld [vmem:[%s5] sm:$0x1]
    %v601 = vlaneseq
    %v602 = vshrl.u32 %v601, 7
    %v603 = vsub.s32 0, %v602
    %v604 = vrot.slane %v599, %v603
    %v606 = vmul.f32 %v598, %v604
    %607 = vadd.xlane.f32.xlu0 %v606
    %v608 = vpop.xlane.xlu0 %607
    %s609 = sld [smem:[#allocation3]]
    %v610 = vstv %s609
    %v611 = vadd.f32 %v608, %v610
    %v612 = vxor.u32 %v611, 2147483648
    %v613 = vmul.f32 %v612, 1.442695
    %v614 = vpow.pop %v613
    %v615 = vadd.f32 %v614, 1.0
    %v616 = vrcp.pop %v615
    %v617 = vmul.f32 1.0, %v616
    %618 = vst [vmem:[#allocation13] sm:$0xff] %v617
    // Predicated region
    $region42: #{tpu_custom_call.1} parent=1 // pred_check
      _
    $region43: #{tpu_custom_call.1} parent=1 // pred_check_branch
      %620 = sbr.rel (0) target = $region45
    $region44: #{tpu_custom_call.1} parent=1 // pred_region
      %s622 = ssub.s32 128, 128
      %623 = vsyncadd [#allocation6], %s622
      %s625 = sshll.u32 [#allocation10], 4
      %s626 = int_to_ptr.vmem [resolvable:$true] %s625
      %628 = dma.vmem_to_hbm [thread:$0]  %s626, 128, %s7, [#allocation6]
    $region45: #{tpu_custom_call.1} parent=1 // pred_fallthru
      _
    // Predicated region
    $region46: #{tpu_custom_call.1} parent=1 // pred_check
      _
    $region47: #{tpu_custom_call.1} parent=1 // pred_check_branch
      %630 = sbr.rel (0) target = $region49
    $region48: #{tpu_custom_call.1} parent=1 // pred_region
      %s632 = ssub.s32 128, 128
      %633 = vsyncadd [#allocation12], %s632
      %s635 = sshll.u32 [#allocation11], 4
      %s636 = int_to_ptr.vmem [resolvable:$true] %s635
      %638 = dma.vmem_to_hbm [thread:$0]  %s636, 128, %s8, [#allocation12]
    $region49: #{tpu_custom_call.1} parent=1 // pred_fallthru
      _
    // Predicated region
    $region50: #{tpu_custom_call.1} parent=1 // pred_check
      _
    $region51: #{tpu_custom_call.1} parent=1 // pred_check_branch
      %640 = sbr.rel (0) target = $region53
    $region52: #{tpu_custom_call.1} parent=1 // pred_region
      %s642 = ssub.s32 128, 128
      %643 = vsyncadd [#allocation12], %s642
      %s645 = sshll.u32 [#allocation13], 4
      %s646 = int_to_ptr.vmem [resolvable:$true] %s645
      %648 = dma.vmem_to_hbm [thread:$0]  %s646, 128, %s9, [#allocation12]
    $region53: #{tpu_custom_call.1} parent=1 // pred_fallthru
      _
    // Predicated region
    $region54: #{tpu_custom_call.1} parent=1 // pred_check
      _
    $region55: #{tpu_custom_call.1} parent=1 // pred_check_branch
      %650 = sbr.rel (0) target = $region57
    $region56: #{tpu_custom_call.1} parent=1 // pred_region
      %651 = dma.done [#allocation6], 128
    $region57: #{tpu_custom_call.1} parent=1 // pred_fallthru
      _
    // Predicated region
    $region58: #{tpu_custom_call.1} parent=1 // pred_check
      _
    $region59: #{tpu_custom_call.1} parent=1 // pred_check_branch
      %653 = sbr.rel (0) target = $region61
    $region60: #{tpu_custom_call.1} parent=1 // pred_region
      %654 = dma.done [#allocation12], 128
    $region61: #{tpu_custom_call.1} parent=1 // pred_fallthru
      _
    // Predicated region
    $region62: #{tpu_custom_call.1} parent=1 // pred_check
      _
    $region63: #{tpu_custom_call.1} parent=1 // pred_check_branch
      %656 = sbr.rel (0) target = $region65
    $region64: #{tpu_custom_call.1} parent=1 // pred_region
      %657 = dma.done [#allocation12], 128
    $region65: #{tpu_custom_call.1} parent=1 // pred_fallthru
      _
    %658 = vsyncpa [#allocation5], 1
    %659 = vsyncpa [#allocation8], 1
    %660 = vsyncpa [#allocation6], 1
    %661 = vsyncpa [#allocation12], 1

</llo_original>
